<compile_context>
chip_gen: v6e
topology: v6e:2x2x1
jax: 0.10.0
libtpu: 0.0.40
codegen_flags: <defaults>
</compile_context>

<pallas_src>
import math

import jax
import jax.numpy as jnp
from jax import lax
from jax.experimental import pallas as pl
from jax.experimental.pallas import tpu as pltpu

INF = 1e12  # large constant used by reference GlobalPointer implementations


def _make_kernel(S, H, G, head_size):
    hd = head_size
    hd2 = hd // 2

    def kernel(x_ref, w_ref, b_ref, sin_ref, cos_ref, m_ref, o_ref):
        # Grouped per-head projection on the MXU (bf16 in, f32 accumulate).
        x = x_ref[0]                      # [S, H]          bf16
        w = w_ref[0]                      # [H, G*2*hd]     bf16 (q cols pre-scaled)
        bias = b_ref[0]                   # [1, G*2*hd]     f32  (q part pre-scaled)
        proj = jnp.dot(x, w, preferred_element_type=jnp.float32) + bias   # [S, G*2*hd] f32

        sin = sin_ref[...]                # [S, hd2] f32
        cos = cos_ref[...]                # [S, hd2] f32
        mask = m_ref[0]                   # [S, S]   f32 (pre-combined, pre-scaled penalty)

        # Contract the trailing head-dim of both operands: one K=hd MXU pass per head,
        # no transpose, no extra S x S accumulator.
        dn = (((1,), (1,)), ((), ()))
        for g in range(G):                # static unroll over the grouped heads
            base = g * 2 * hd
            q1 = proj[:, base:base + hd2]
            q2 = proj[:, base + hd2:base + hd]
            k1 = proj[:, base + hd:base + hd + hd2]
            k2 = proj[:, base + hd + hd2:base + 2 * hd]
            # RoPE in de-interleaved form (f32 math, bf16 only for the MXU).
            qr = jnp.concatenate([q1 * cos - q2 * sin, q1 * sin + q2 * cos],
                                 axis=-1).astype(jnp.bfloat16)        # [S, hd]
            kr = jnp.concatenate([k1 * cos - k2 * sin, k1 * sin + k2 * cos],
                                 axis=-1).astype(jnp.bfloat16)        # [S, hd]
            lg = lax.dot_general(qr, kr, dn, preferred_element_type=jnp.float32)
            o_ref[0, g] = (lg - mask).astype(o_ref.dtype)

    return kernel


def _vmem_limit_bytes(S, H, hd, G, out_itemsize):
    out_buf = 2 * G * S * S * out_itemsize          # output double buffer
    mask_buf = 2 * S * S * 4                        # combined mask double buffer
    x_buf = 2 * S * H * 2
    w_buf = 2 * H * G * 2 * hd * 2
    rope_buf = 2 * 2 * S * (hd // 2) * 4
    temps = S * G * 2 * hd * 4 + 4 * S * hd * 4 + 2 * S * S * 4
    est = out_buf + mask_buf + x_buf + w_buf + rope_buf + temps
    return int(min(96 * 2 ** 20, max(32 * 2 ** 20, 2 * est)))


def global_pointer(x, W, b, attention_mask=None, *, heads, head_size,
                   max_length=512, out_dtype=jnp.float32, head_group=None):
    """Pallas GlobalPointer forward.

    x: [B, S, H]; W: [H, heads*2*head_size] (== torch weight.T); b: [heads*2*head_size].
    Returns logits [B, heads, S, S] matching the PyTorch module (already / sqrt(head_size)).
    """
    B, S, H = x.shape
    hd = head_size
    hd2 = hd // 2
    scale = 1.0 / math.sqrt(hd)
    mask_val = INF * scale  # masks are applied to already-scaled logits

    if head_group is None:
        head_group = 2 if heads % 2 == 0 else 1
    G = head_group
    assert heads % G == 0, "head_group must divide heads"

    # RoPE tables (offset = 0), built for max_length then sliced like the module.
    inv_freq = 1.0 / (10000.0 ** (jnp.arange(0, hd, 2, dtype=jnp.float32) / hd))
    t = jnp.arange(max_length, dtype=jnp.float32)
    freqs = t[:, None] * inv_freq[None, :]              # [max_length, hd//2]
    sin = jnp.sin(freqs)[:S]
    cos = jnp.cos(freqs)[:S]

    # Permute dense columns into head-major, de-interleaved [q1|q2|k1|k2] layout,
    # fold 1/sqrt(head_size) into the q columns (and q bias), then group G heads/step.
    qk_scale = jnp.array([scale, 1.0], dtype=jnp.float32)
    W5 = W.astype(jnp.float32).reshape(H, heads, 2, hd2, 2)        # (H, h, t, j, c)
    W5 = W5.transpose(0, 1, 2, 4, 3)                               # (H, h, t, c, j)
    W5 = W5 * qk_scale.reshape(1, 1, 2, 1, 1)
    Wp = W5.transpose(1, 0, 2, 3, 4).reshape(heads, H, 2 * hd)     # (h, H, 2*hd)
    Wg = (Wp.reshape(heads // G, G, H, 2 * hd)
             .transpose(0, 2, 1, 3)                                # (hg, H, g, 2*hd)
             .reshape(heads // G, H, G * 2 * hd)
             .astype(jnp.bfloat16))

    b5 = b.astype(jnp.float32).reshape(heads, 2, hd2, 2)           # (h, t, j, c)
    b5 = b5.transpose(0, 1, 3, 2) * qk_scale.reshape(1, 2, 1, 1)   # (h, t, c, j)
    bp = b5.reshape(heads, 1, 2 * hd)
    bg = (bp.reshape(heads // G, G, 1, 2 * hd)
             .transpose(0, 2, 1, 3)
             .reshape(heads // G, 1, G * 2 * hd))

    # Pre-combined, pre-scaled (padding + tril) penalty mask: resident per batch,
    # single in-kernel subtract, no S x S iota/tril/pen temporaries in the kernel.
    if attention_mask is None:
        am = jnp.ones((B, S), dtype=jnp.float32)
    else:
        am = attention_mask.astype(jnp.float32)
    pen = 1.0 - am[:, :, None] * am[:, None, :]                    # [B, S, S]
    tril = jnp.tril(jnp.ones((S, S), jnp.float32), k=-1)
    mask = (pen + tril[None]) * mask_val                           # [B, S, S] f32

    kernel = _make_kernel(S, H, G, hd)
    out = pl.pallas_call(
        kernel,
        out_shape=jax.ShapeDtypeStruct((B, heads, S, S), out_dtype),
        grid_spec=pltpu.PrefetchScalarGridSpec(
            num_scalar_prefetch=0,
            grid=(B, heads // G),                                  # batch outer, heads inner
            in_specs=[
                pl.BlockSpec((1, S, H), lambda bi, hi: (bi, 0, 0)),            # x (per batch)
                pl.BlockSpec((1, H, G * 2 * hd), lambda bi, hi: (hi, 0, 0)),   # W (per head group)
                pl.BlockSpec((1, 1, G * 2 * hd), lambda bi, hi: (hi, 0, 0)),   # bias
                pl.BlockSpec((S, hd2), lambda bi, hi: (0, 0)),                 # sin (resident)
                pl.BlockSpec((S, hd2), lambda bi, hi: (0, 0)),                 # cos (resident)
                pl.BlockSpec((1, S, S), lambda bi, hi: (bi, 0, 0)),            # combined mask
            ],
            out_specs=pl.BlockSpec((1, G, S, S), lambda bi, hi: (bi, hi, 0, 0)),
        ),
        compiler_params=pltpu.CompilerParams(
            dimension_semantics=("parallel", "parallel"),
            vmem_limit_bytes=_vmem_limit_bytes(S, H, hd, G, jnp.dtype(out_dtype).itemsize),
        ),
    )(x.astype(jnp.bfloat16), Wg, bg, sin, cos, mask)
    return out


def global_pointer_ref(x, W, b, attention_mask, *, heads, head_size, max_length=512):
    """Pure-JAX reference reproducing the PyTorch (interleaved RoPE) semantics."""
    B, S, H = x.shape
    hd = head_size
    proj = jnp.einsum('bsh,hf->bsf', x, W, precision=lax.Precision.HIGHEST) + b
    proj = proj.reshape(B, S, heads, 2, hd)
    qw, kw = proj[..., 0, :], proj[..., 1, :]

    inv_freq = 1.0 / (10000.0 ** (jnp.arange(0, hd, 2, dtype=jnp.float32) / hd))
    t = jnp.arange(max_length, dtype=jnp.float32)
    freqs = t[:, None] * inv_freq[None, :]
    sin = jnp.sin(freqs)[:S][:, None, :]   # head_axis=-2 unsqueeze
    cos = jnp.cos(freqs)[:S][:, None, :]

    def rope(t_):
        t1, t2 = t_[..., 0::2], t_[..., 1::2]
        return jnp.stack([t1 * cos - t2 * sin, t1 * sin + t2 * cos],
                         axis=-1).reshape(t_.shape)

    qw, kw = rope(qw), rope(kw)
    logits = jnp.einsum('bmhd,bnhd->bhmn', qw, kw, precision=lax.Precision.HIGHEST)
    if attention_mask is not None:
        pen = 1.0 - attention_mask[:, None, None, :] * attention_mask[:, None, :, None]
        logits = logits - pen * INF
    tril = jnp.tril(jnp.ones((S, S), jnp.float32), k=-1)
    logits = logits - tril * INF
    return logits / math.sqrt(hd)


if __name__ == "__main__":
    # small shapes consistent with the module
    B, S, H = 2, 8, 32
    HEADS, HEAD_SIZE, MAX_LEN = 4, 16, 64

    key = jax.random.PRNGKey(0)
    kx, kw, kb, km = jax.random.split(key, 4)
    x = jax.random.normal(kx, (B, S, H), dtype=jnp.float32)
    W = 0.05 * jax.random.normal(kw, (H, HEADS * 2 * HEAD_SIZE), dtype=jnp.float32)
    b = 0.05 * jax.random.normal(kb, (HEADS * 2 * HEAD_SIZE,), dtype=jnp.float32)
    # attention mask with some padding on the first sequence
    attention_mask = jnp.array(
        [[1, 1, 1, 1, 1, 1, 0, 0],
         [1, 1, 1, 1, 1, 1, 1, 1]], dtype=jnp.float32)

    out = global_pointer(x, W, b, attention_mask,
                         heads=HEADS, head_size=HEAD_SIZE, max_length=MAX_LEN)
    out = jax.block_until_ready(out)

    ref = global_pointer_ref(x, W, b, attention_mask,
                             heads=HEADS, head_size=HEAD_SIZE, max_length=MAX_LEN)
    assert out.shape == (B, HEADS, S, S)
    # bf16 MXU inputs with f32 accumulation: loose tolerance vs the HIGHEST-precision f32 reference
    assert jnp.allclose(out, ref, rtol=2e-3, atol=2e-2), "mismatch vs reference"
    print("KERNEL_OK")
</pallas_src>

<mosaic_0001>
module attributes {stable_mosaic.version = 11 : i64} {
  func.func @kernel(%arg0: i32, %arg1: i32, %arg2: memref<1x8x32xbf16, #tpu.memory_space<vmem>>, %arg3: memref<1x32x64xbf16, #tpu.memory_space<vmem>>, %arg4: memref<1x1x64xf32, #tpu.memory_space<vmem>>, %arg5: memref<8x8xf32, #tpu.memory_space<vmem>>, %arg6: memref<8x8xf32, #tpu.memory_space<vmem>>, %arg7: memref<1x8x8xf32, #tpu.memory_space<vmem>>, %arg8: memref<1x2x8x8xf32, #tpu.memory_space<vmem>>) attributes {dimension_semantics = [#tpu.dimension_semantics<parallel>, #tpu.dimension_semantics<parallel>], iteration_bounds = array<i64: 2, 2>, scalar_prefetch = 0 : i64, scratch_operands = 0 : i64, tpu.core_type = #tpu.core_type<tc>, window_params = [{transform_indices = @transform_0, window_bounds = array<i64: 1, 8, 32>}, {transform_indices = @transform_1, window_bounds = array<i64: 1, 32, 64>}, {transform_indices = @transform_2, window_bounds = array<i64: 1, 1, 64>}, {pipeline_mode = #tpu.pipeline_mode<synchronous>, transform_indices = @transform_3, window_bounds = array<i64: 8, 8>}, {pipeline_mode = #tpu.pipeline_mode<synchronous>, transform_indices = @transform_4, window_bounds = array<i64: 8, 8>}, {transform_indices = @transform_5, window_bounds = array<i64: 1, 8, 8>}, {transform_indices = @transform_6, window_bounds = array<i64: 1, 2, 8, 8>}]} {
    %c0 = arith.constant 0 : index
    %c0_0 = arith.constant 0 : index
    %c0_1 = arith.constant 0 : index
    %0 = vector.load %arg2[%c0, %c0_0, %c0_1] : memref<1x8x32xbf16, #tpu.memory_space<vmem>>, vector<1x8x32xbf16>
    %1 = vector.shape_cast %0 : vector<1x8x32xbf16> to vector<8x32xbf16>
    %c0_2 = arith.constant 0 : index
    %c0_3 = arith.constant 0 : index
    %c0_4 = arith.constant 0 : index
    %2 = vector.load %arg3[%c0_2, %c0_3, %c0_4] : memref<1x32x64xbf16, #tpu.memory_space<vmem>>, vector<1x32x64xbf16>
    %3 = vector.shape_cast %2 : vector<1x32x64xbf16> to vector<32x64xbf16>
    %c0_5 = arith.constant 0 : index
    %c0_6 = arith.constant 0 : index
    %c0_7 = arith.constant 0 : index
    %4 = vector.load %arg4[%c0_5, %c0_6, %c0_7] : memref<1x1x64xf32, #tpu.memory_space<vmem>>, vector<1x1x64xf32>
    %5 = vector.shape_cast %4 : vector<1x1x64xf32> to vector<1x64xf32>
    %cst = arith.constant dense<0.000000e+00> : vector<8x64xf32>
    %6 = tpu.matmul %1, %3, %cst {dimension_numbers = #tpu.dot_dimension_numbers<[1], [0], [0], [1], [0, 0, 1, 1], [], []>} : vector<8x32xbf16>, vector<32x64xbf16>, vector<8x64xf32> -> vector<8x64xf32>
    %7 = vector.broadcast %5 : vector<1x64xf32> to vector<8x64xf32>
    %8 = arith.addf %6, %7 : vector<8x64xf32>
    %c0_8 = arith.constant 0 : index
    %c0_9 = arith.constant 0 : index
    %9 = vector.load %arg5[%c0_8, %c0_9] : memref<8x8xf32, #tpu.memory_space<vmem>>, vector<8x8xf32>
    %c0_10 = arith.constant 0 : index
    %c0_11 = arith.constant 0 : index
    %10 = vector.load %arg6[%c0_10, %c0_11] : memref<8x8xf32, #tpu.memory_space<vmem>>, vector<8x8xf32>
    %c0_12 = arith.constant 0 : index
    %c0_13 = arith.constant 0 : index
    %c0_14 = arith.constant 0 : index
    %11 = vector.load %arg7[%c0_12, %c0_13, %c0_14] : memref<1x8x8xf32, #tpu.memory_space<vmem>>, vector<1x8x8xf32>
    %12 = vector.shape_cast %11 : vector<1x8x8xf32> to vector<8x8xf32>
    %13 = vector.extract_strided_slice %8 {offsets = [0, 0], sizes = [8, 8], strides = [1, 1]} : vector<8x64xf32> to vector<8x8xf32>
    %14 = vector.extract_strided_slice %8 {offsets = [0, 8], sizes = [8, 8], strides = [1, 1]} : vector<8x64xf32> to vector<8x8xf32>
    %15 = vector.extract_strided_slice %8 {offsets = [0, 16], sizes = [8, 8], strides = [1, 1]} : vector<8x64xf32> to vector<8x8xf32>
    %16 = vector.extract_strided_slice %8 {offsets = [0, 24], sizes = [8, 8], strides = [1, 1]} : vector<8x64xf32> to vector<8x8xf32>
    %17 = arith.mulf %13, %10 : vector<8x8xf32>
    %18 = arith.mulf %14, %9 : vector<8x8xf32>
    %19 = arith.subf %17, %18 : vector<8x8xf32>
    %20 = arith.mulf %13, %9 : vector<8x8xf32>
    %21 = arith.mulf %14, %10 : vector<8x8xf32>
    %22 = arith.addf %20, %21 : vector<8x8xf32>
    %23 = tpu.concatenate %19, %22 in 1 : vector<8x8xf32>, vector<8x8xf32> -> vector<8x16xf32>
    %24 = arith.truncf %23 : vector<8x16xf32> to vector<8x16xbf16>
    %25 = arith.mulf %15, %10 : vector<8x8xf32>
    %26 = arith.mulf %16, %9 : vector<8x8xf32>
    %27 = arith.subf %25, %26 : vector<8x8xf32>
    %28 = arith.mulf %15, %9 : vector<8x8xf32>
    %29 = arith.mulf %16, %10 : vector<8x8xf32>
    %30 = arith.addf %28, %29 : vector<8x8xf32>
    %31 = tpu.concatenate %27, %30 in 1 : vector<8x8xf32>, vector<8x8xf32> -> vector<8x16xf32>
    %32 = arith.truncf %31 : vector<8x16xf32> to vector<8x16xbf16>
    %cst_15 = arith.constant dense<0.000000e+00> : vector<8x8xf32>
    %33 = tpu.matmul %24, %32, %cst_15 {dimension_numbers = #tpu.dot_dimension_numbers<[1], [1], [0], [0], [0, 0, 1, 0], [], []>} : vector<8x16xbf16>, vector<8x16xbf16>, vector<8x8xf32> -> vector<8x8xf32>
    %34 = arith.subf %33, %12 : vector<8x8xf32>
    %c0_16 = arith.constant 0 : index
    %c0_17 = arith.constant 0 : index
    %c0_18 = arith.constant 0 : index
    %c0_19 = arith.constant 0 : index
    %35 = vector.load %arg8[%c0_16, %c0_17, %c0_18, %c0_19] : memref<1x2x8x8xf32, #tpu.memory_space<vmem>>, vector<1x1x8x8xf32>
    %36 = vector.shape_cast %35 : vector<1x1x8x8xf32> to vector<8x8xf32>
    %37 = vector.shape_cast %34 : vector<8x8xf32> to vector<1x1x8x8xf32>
    tpu.vector_store %arg8[%c0_16, %c0_17, %c0_18, %c0_19], %37 {strides = array<i32>} : memref<1x2x8x8xf32, #tpu.memory_space<vmem>>, vector<1x1x8x8xf32>,
    %38 = vector.extract_strided_slice %8 {offsets = [0, 32], sizes = [8, 8], strides = [1, 1]} : vector<8x64xf32> to vector<8x8xf32>
    %39 = vector.extract_strided_slice %8 {offsets = [0, 40], sizes = [8, 8], strides = [1, 1]} : vector<8x64xf32> to vector<8x8xf32>
    %40 = vector.extract_strided_slice %8 {offsets = [0, 48], sizes = [8, 8], strides = [1, 1]} : vector<8x64xf32> to vector<8x8xf32>
    %41 = vector.extract_strided_slice %8 {offsets = [0, 56], sizes = [8, 8], strides = [1, 1]} : vector<8x64xf32> to vector<8x8xf32>
    %42 = arith.mulf %38, %10 : vector<8x8xf32>
    %43 = arith.mulf %39, %9 : vector<8x8xf32>
    %44 = arith.subf %42, %43 : vector<8x8xf32>
    %45 = arith.mulf %38, %9 : vector<8x8xf32>
    %46 = arith.mulf %39, %10 : vector<8x8xf32>
    %47 = arith.addf %45, %46 : vector<8x8xf32>
    %48 = tpu.concatenate %44, %47 in 1 : vector<8x8xf32>, vector<8x8xf32> -> vector<8x16xf32>
    %49 = arith.truncf %48 : vector<8x16xf32> to vector<8x16xbf16>
    %50 = arith.mulf %40, %10 : vector<8x8xf32>
    %51 = arith.mulf %41, %9 : vector<8x8xf32>
    %52 = arith.subf %50, %51 : vector<8x8xf32>
    %53 = arith.mulf %40, %9 : vector<8x8xf32>
    %54 = arith.mulf %41, %10 : vector<8x8xf32>
    %55 = arith.addf %53, %54 : vector<8x8xf32>
    %56 = tpu.concatenate %52, %55 in 1 : vector<8x8xf32>, vector<8x8xf32> -> vector<8x16xf32>
    %57 = arith.truncf %56 : vector<8x16xf32> to vector<8x16xbf16>
    %cst_20 = arith.constant dense<0.000000e+00> : vector<8x8xf32>
    %58 = tpu.matmul %49, %57, %cst_20 {dimension_numbers = #tpu.dot_dimension_numbers<[1], [1], [0], [0], [0, 0, 1, 0], [], []>} : vector<8x16xbf16>, vector<8x16xbf16>, vector<8x8xf32> -> vector<8x8xf32>
    %59 = arith.subf %58, %12 : vector<8x8xf32>
    %c0_21 = arith.constant 0 : index
    %c1 = arith.constant 1 : index
    %c0_22 = arith.constant 0 : index
    %c0_23 = arith.constant 0 : index
    %60 = vector.load %arg8[%c0_21, %c1, %c0_22, %c0_23] : memref<1x2x8x8xf32, #tpu.memory_space<vmem>>, vector<1x1x8x8xf32>
    %61 = vector.shape_cast %60 : vector<1x1x8x8xf32> to vector<8x8xf32>
    %62 = vector.shape_cast %59 : vector<8x8xf32> to vector<1x1x8x8xf32>
    tpu.vector_store %arg8[%c0_21, %c1, %c0_22, %c0_23], %62 {strides = array<i32>} : memref<1x2x8x8xf32, #tpu.memory_space<vmem>>, vector<1x1x8x8xf32>,
    return
  }
  func.func @transform_0(%arg0: i32, %arg1: i32) -> (i32, i32, i32) {
    %c0_i32 = arith.constant 0 : i32
    %c0_i32_0 = arith.constant 0 : i32
    %c0_i32_1 = arith.constant 0 : i32
    return %arg0, %c0_i32, %c0_i32_0 : i32, i32, i32
  }
  func.func @transform_1(%arg0: i32, %arg1: i32) -> (i32, i32, i32) {
    %c0_i32 = arith.constant 0 : i32
    %c0_i32_0 = arith.constant 0 : i32
    %c0_i32_1 = arith.constant 0 : i32
    return %arg1, %c0_i32, %c0_i32_0 : i32, i32, i32
  }
  func.func @transform_2(%arg0: i32, %arg1: i32) -> (i32, i32, i32) {
    %c0_i32 = arith.constant 0 : i32
    %c0_i32_0 = arith.constant 0 : i32
    %c0_i32_1 = arith.constant 0 : i32
    return %arg1, %c0_i32, %c0_i32_0 : i32, i32, i32
  }
  func.func @transform_3(%arg0: i32, %arg1: i32) -> (i32, i32) {
    %c0_i32 = arith.constant 0 : i32
    %c0_i32_0 = arith.constant 0 : i32
    %c0_i32_1 = arith.constant 0 : i32
    return %c0_i32, %c0_i32_0 : i32, i32
  }
  func.func @transform_4(%arg0: i32, %arg1: i32) -> (i32, i32) {
    %c0_i32 = arith.constant 0 : i32
    %c0_i32_0 = arith.constant 0 : i32
    %c0_i32_1 = arith.constant 0 : i32
    return %c0_i32, %c0_i32_0 : i32, i32
  }
  func.func @transform_5(%arg0: i32, %arg1: i32) -> (i32, i32, i32) {
    %c0_i32 = arith.constant 0 : i32
    %c0_i32_0 = arith.constant 0 : i32
    %c0_i32_1 = arith.constant 0 : i32
    return %arg0, %c0_i32, %c0_i32_0 : i32, i32, i32
  }
  func.func @transform_6(%arg0: i32, %arg1: i32) -> (i32, i32, i32, i32) {
    %c0_i32 = arith.constant 0 : i32
    %c0_i32_0 = arith.constant 0 : i32
    %c0_i32_1 = arith.constant 0 : i32
    return %arg0, %arg1, %c0_i32, %c0_i32_0 : i32, i32, i32, i32
  }
}

</mosaic_0001>

<llo_original>
// kernel: tpu_custom_call.1
$region0: #{tpu_custom_call.1}
  #allocation0 [shape = 'u32[]', space=smem, size = 0x4, offset = 0x4, fixed_abs, tag = 'smem constant byte address 0x4 - core index']
  #allocation1 [shape = 'u32[144,128]{1,0:T(1,128)}', space=vmem, size = 0x12000, scoped, tag = 'internal scratch']
  %s0 = inlined_call_operand.hbm [shape: bf16[2,8,32], index: 0, kind: input, shape index: {}]
  %s1 = inlined_call_operand.hbm [shape: bf16[2,32,64], index: 1, kind: input, shape index: {}]
  %s2 = inlined_call_operand.vmem [shape: f32[2,1,64], index: 2, kind: input, shape index: {}]
  %s3 = inlined_call_operand.hbm [shape: f32[8,8], index: 3, kind: input, shape index: {}]
  %s4 = inlined_call_operand.hbm [shape: f32[8,8], index: 4, kind: input, shape index: {}]
  %s5 = inlined_call_operand.hbm [shape: f32[2,8,8], index: 5, kind: input, shape index: {}]
  %s6 = inlined_call_operand.hbm [shape: f32[2,4,8,8], index: 6, kind: output, shape index: {}]
  %s7 = sld [smem:[#allocation0]]
  $region77: #{tpu_custom_call.1} parent=0
    _
  %s9 = ssub.s32 1, %s7
  %s10 = scalar_select 0, %s9, %s7
  $region1: #{tpu_custom_call.1} parent=0
    #allocation2 [shape = 'u8[4096]{0}', space=vmem, size = 0x1000, scoped, tag = 'input window, operand 0']
    #allocation3 [shape = 's32[2]{0}', space=sflag, size = 0x8, scoped, tag = 'scoped memory for tpu_custom_call.1']
    #allocation4 [shape = 's32[2]{0}', space=sflag, size = 0x8, scoped, tag = 'scoped memory for tpu_custom_call.1']
    #allocation5 [shape = 'u8[16384]{0}', space=vmem, size = 0x4000, scoped, tag = 'input window, operand 1']
    #allocation6 [shape = 's32[2]{0}', space=sflag, size = 0x8, scoped, tag = 'scoped memory for tpu_custom_call.1']
    #allocation7 [shape = 'u8[4096]{0}', space=vmem, size = 0x1000, scoped, tag = 'input window, operand 3, single buffered']
    #allocation8 [shape = 'u8[4096]{0}', space=vmem, size = 0x1000, scoped, tag = 'input window, operand 4, single buffered']
    #allocation9 [shape = 's32[1]{0}', space=sflag, size = 0x4, scoped, tag = 'scoped memory for tpu_custom_call.1']
    #allocation10 [shape = 'u8[8192]{0}', space=vmem, size = 0x2000, scoped, tag = 'input window, operand 5']
    #allocation11 [shape = 'u8[16384]{0}', space=vmem, size = 0x4000, scoped, tag = 'output window, operand 0']
    %11 = vsyncpa [#allocation3], 0
    %s12 = scalar_lea.sflag [#allocation3], 1
    %13 = vsyncpa %s12, 0
    %14 = vsyncpa [#allocation6], 0
    %s15 = scalar_lea.sflag [#allocation6], 1
    %16 = vsyncpa %s15, 0
    %17 = vsyncpa [#allocation9], 0
    %18 = vsyncpa [#allocation4], 0
    %s19 = scalar_lea.sflag [#allocation4], 1
    %20 = vsyncpa %s19, 0
    loop: start=0, step=1, limit=6
    $region2: #{tpu_custom_call.1} parent=1 // loop_pre_header
      _
    $region3: #{tpu_custom_call.1} parent=1 // loop_header
      %s22 = sphi 0, %s26
      %p23 = scmp.ge.s32.totalorder %s22, 6
      %s29 = sphi 0, %s41
      %s30 = sphi 0, %s37
      %s31 = sphi 0, %s29
      %s32 = sphi 0, %s30
      %s33 = sphi 0, %s31
      %s34 = sphi 0, %s32
      %s44 = sphi 0, %s46
      %s47 = sphi 0, %s44
      %s48 = sphi 0, %s47
      %s64 = sphi 0, %s48
      %s70 = sphi 0, %s72
      %s73 = sphi 0, %s70
      %s74 = sphi 0, %s73
      %s90 = sphi 0, %s74
      %s96 = sphi 0, %s98
      %s99 = sphi 0, %s96
      %s100 = sphi 0, %s99
      %s116 = sphi 0, %s100
      %s120 = sphi 0, %s120
      %s122 = sphi 0, %s120
      %s123 = sphi 0, %s122
      %s137 = sphi 0, %s123
      %s141 = sphi 0, %s141
      %s143 = sphi 0, %s141
      %s144 = sphi 0, %s143
      %s158 = sphi 0, %s144
      %s164 = sphi 0, %s166
      %s167 = sphi 0, %s164
      %s168 = sphi 0, %s167
      %s184 = sphi 0, %s168
      %s192 = sphi 0, %s194
      %s195 = sphi 0, %s192
      %s196 = sphi 0, %s195
      %s212 = sphi 0, %s196
    $region4: #{tpu_custom_call.1} parent=1 // loop_header_branch
      %25 = sbr.rel (%p23) target = $region8
    $region5: #{tpu_custom_call.1} parent=1 // loop_body
      %s27 = ssub.s32 %s22, 1
      %s28 = ssub.s32 %s22, 2
      %s35 = sadd.s32 1, %s30
      %p36 = scmp.ge.s32.totalorder %s35, 2
      %s37 = scalar_select %p36, 0, %s35
      %s38 = sadd.s32 1, %s29
      %s39 = scalar_select %p36, %s38, %s29
      %p40 = scmp.ge.s32.totalorder %s39, 2
      %s41 = scalar_select %p40, 0, %s39
      %s42 = ssub.s32 %s29, %s41
      %p43 = scmp.eq.s32.totalorder %s42, 0
      %s45 = sadd.s32 %s44, 1
      %s46 = scalar_select %p43, %s44, %s45
      %p49 = pneg %p43
      %p50 = scmp.eq.s32.totalorder %s22, 3
      %p51 = por %p49, %p50
      %p52 = scmp.ne.s32.totalorder %s44, %s47
      %p53 = scmp.eq.s32.totalorder %s22, 0
      %p54 = por %p52, %p53
      %p55 = scmp.ne.s32.totalorder %s44, %s47
      %p56 = scmp.eq.s32.totalorder %s27, 3
      %p57 = por %p55, %p56
      %p58 = scmp.ne.s32.totalorder %s47, %s48
      %p59 = scmp.eq.s32.totalorder %s27, 0
      %p60 = por %p58, %p59
      %p61 = scmp.ne.s32.totalorder %s47, %s48
      %p62 = scmp.eq.s32.totalorder %s28, 3
      %p63 = por %p61, %p62
      %p65 = scmp.ne.s32.totalorder %s48, %s64
      %p66 = scmp.eq.s32.totalorder %s28, 0
      %p67 = por %p65, %p66
      %s68 = ssub.s32 %s30, %s37
      %p69 = scmp.eq.s32.totalorder %s68, 0
      %s71 = sadd.s32 %s70, 1
      %s72 = scalar_select %p69, %s70, %s71
      %p75 = pneg %p69
      %p76 = scmp.eq.s32.totalorder %s22, 3
      %p77 = por %p75, %p76
      %p78 = scmp.ne.s32.totalorder %s70, %s73
      %p79 = scmp.eq.s32.totalorder %s22, 0
      %p80 = por %p78, %p79
      %p81 = scmp.ne.s32.totalorder %s70, %s73
      %p82 = scmp.eq.s32.totalorder %s27, 3
      %p83 = por %p81, %p82
      %p84 = scmp.ne.s32.totalorder %s73, %s74
      %p85 = scmp.eq.s32.totalorder %s27, 0
      %p86 = por %p84, %p85
      %p87 = scmp.ne.s32.totalorder %s73, %s74
      %p88 = scmp.eq.s32.totalorder %s28, 3
      %p89 = por %p87, %p88
      %p91 = scmp.ne.s32.totalorder %s74, %s90
      %p92 = scmp.eq.s32.totalorder %s28, 0
      %p93 = por %p91, %p92
      %s94 = ssub.s32 %s30, %s37
      %p95 = scmp.eq.s32.totalorder %s94, 0
      %s97 = sadd.s32 %s96, 1
      %s98 = scalar_select %p95, %s96, %s97
      %p101 = pneg %p95
      %p102 = scmp.eq.s32.totalorder %s22, 3
      %p103 = por %p101, %p102
      %p104 = scmp.ne.s32.totalorder %s96, %s99
      %p105 = scmp.eq.s32.totalorder %s22, 0
      %p106 = por %p104, %p105
      %p107 = scmp.ne.s32.totalorder %s96, %s99
      %p108 = scmp.eq.s32.totalorder %s27, 3
      %p109 = por %p107, %p108
      %p110 = scmp.ne.s32.totalorder %s99, %s100
      %p111 = scmp.eq.s32.totalorder %s27, 0
      %p112 = por %p110, %p111
      %p113 = scmp.ne.s32.totalorder %s99, %s100
      %p114 = scmp.eq.s32.totalorder %s28, 3
      %p115 = por %p113, %p114
      %p117 = scmp.ne.s32.totalorder %s100, %s116
      %p118 = scmp.eq.s32.totalorder %s28, 0
      %p119 = por %p117, %p118
      %s121 = sadd.s32 %s120, 1
      %p124 = scmp.eq.s32.totalorder %s22, 3
      %p125 = scmp.ne.s32.totalorder %s120, %s122
      %p126 = scmp.eq.s32.totalorder %s22, 0
      %p127 = por %p125, %p126
      %p128 = scmp.ne.s32.totalorder %s120, %s122
      %p129 = scmp.eq.s32.totalorder %s27, 3
      %p130 = por %p128, %p129
      %p131 = scmp.ne.s32.totalorder %s122, %s123
      %p132 = scmp.eq.s32.totalorder %s27, 0
      %p133 = por %p131, %p132
      %p134 = scmp.ne.s32.totalorder %s122, %s123
      %p135 = scmp.eq.s32.totalorder %s28, 3
      %p136 = por %p134, %p135
      %p138 = scmp.ne.s32.totalorder %s123, %s137
      %p139 = scmp.eq.s32.totalorder %s28, 0
      %p140 = por %p138, %p139
      %s142 = sadd.s32 %s141, 1
      %p145 = scmp.eq.s32.totalorder %s22, 3
      %p146 = scmp.ne.s32.totalorder %s141, %s143
      %p147 = scmp.eq.s32.totalorder %s22, 0
      %p148 = por %p146, %p147
      %p149 = scmp.ne.s32.totalorder %s141, %s143
      %p150 = scmp.eq.s32.totalorder %s27, 3
      %p151 = por %p149, %p150
      %p152 = scmp.ne.s32.totalorder %s143, %s144
      %p153 = scmp.eq.s32.totalorder %s27, 0
      %p154 = por %p152, %p153
      %p155 = scmp.ne.s32.totalorder %s143, %s144
      %p156 = scmp.eq.s32.totalorder %s28, 3
      %p157 = por %p155, %p156
      %p159 = scmp.ne.s32.totalorder %s144, %s158
      %p160 = scmp.eq.s32.totalorder %s28, 0
      %p161 = por %p159, %p160
      %s162 = ssub.s32 %s29, %s41
      %p163 = scmp.eq.s32.totalorder %s162, 0
      %s165 = sadd.s32 %s164, 1
      %s166 = scalar_select %p163, %s164, %s165
      %p169 = pneg %p163
      %p170 = scmp.eq.s32.totalorder %s22, 3
      %p171 = por %p169, %p170
      %p172 = scmp.ne.s32.totalorder %s164, %s167
      %p173 = scmp.eq.s32.totalorder %s22, 0
      %p174 = por %p172, %p173
      %p175 = scmp.ne.s32.totalorder %s164, %s167
      %p176 = scmp.eq.s32.totalorder %s27, 3
      %p177 = por %p175, %p176
      %p178 = scmp.ne.s32.totalorder %s167, %s168
      %p179 = scmp.eq.s32.totalorder %s27, 0
      %p180 = por %p178, %p179
      %p181 = scmp.ne.s32.totalorder %s167, %s168
      %p182 = scmp.eq.s32.totalorder %s28, 3
      %p183 = por %p181, %p182
      %p185 = scmp.ne.s32.totalorder %s168, %s184
      %p186 = scmp.eq.s32.totalorder %s28, 0
      %p187 = por %p185, %p186
      %s188 = ssub.s32 %s29, %s41
      %s189 = ssub.s32 %s30, %s37
      %s190 = sor.u32 %s188, %s189
      %p191 = scmp.eq.s32.totalorder %s190, 0
      %s193 = sadd.s32 %s192, 1
      %s194 = scalar_select %p191, %s192, %s193
      %p197 = pneg %p191
      %p198 = scmp.eq.s32.totalorder %s22, 3
      %p199 = por %p197, %p198
      %p200 = scmp.ne.s32.totalorder %s192, %s195
      %p201 = scmp.eq.s32.totalorder %s22, 0
      %p202 = por %p200, %p201
      %p203 = scmp.ne.s32.totalorder %s192, %s195
      %p204 = scmp.eq.s32.totalorder %s27, 3
      %p205 = por %p203, %p204
      %p206 = scmp.ne.s32.totalorder %s195, %s196
      %p207 = scmp.eq.s32.totalorder %s27, 0
      %p208 = por %p206, %p207
      %p209 = scmp.ne.s32.totalorder %s195, %s196
      %p210 = scmp.eq.s32.totalorder %s28, 3
      %p211 = por %p209, %p210
      %p213 = scmp.ne.s32.totalorder %s196, %s212
      %p214 = scmp.eq.s32.totalorder %s28, 0
      %p215 = por %p213, %p214
      %p216 = scmp.le.s32.totalorder 1, %s22
      %p217 = scmp.lt.s32.totalorder %s22, 5
      %p218 = pnand %p216, %p217
      %p219 = pneg %p218
      // Predicated region
      $region9: #{tpu_custom_call.1} parent=5 // pred_check
        _
      $region10: #{tpu_custom_call.1} parent=5 // pred_check_branch
        %221 = sbr.rel (%p218) target = $region12
      $region11: #{tpu_custom_call.1} parent=5 // pred_region
        %s222 = ssub.s32 %s22, 1
        // Predicated region
        $region13: #{tpu_custom_call.1} parent=11 // pred_check
          %p223 = pneg %p133
        $region14: #{tpu_custom_call.1} parent=11 // pred_check_branch
          %225 = sbr.rel (%p223) target = $region16
        $region15: #{tpu_custom_call.1} parent=11 // pred_region
          %s227 = ssub.s32 128, 128
          %228 = vsyncadd [#allocation6], %s227
          %s230 = sshll.u32 [#allocation7], 4
          %s231 = int_to_ptr.vmem [resolvable:$true] %s230
          %233 = dma.hbm_to_vmem [thread:$0]  %s3, 128, %s231, [#allocation6]
        $region16: #{tpu_custom_call.1} parent=11 // pred_fallthru
          _
        // Predicated region
        $region17: #{tpu_custom_call.1} parent=11 // pred_check
          %p234 = pneg %p154
        $region18: #{tpu_custom_call.1} parent=11 // pred_check_branch
          %236 = sbr.rel (%p234) target = $region20
        $region19: #{tpu_custom_call.1} parent=11 // pred_region
          %s238 = ssub.s32 128, 128
          %239 = vsyncadd [#allocation9], %s238
          %s241 = sshll.u32 [#allocation8], 4
          %s242 = int_to_ptr.vmem [resolvable:$true] %s241
          %244 = dma.hbm_to_vmem [thread:$0]  %s4, 128, %s242, [#allocation9]
        $region20: #{tpu_custom_call.1} parent=11 // pred_fallthru
          _
      $region12: #{tpu_custom_call.1} parent=5 // pred_fallthru
        _
      %p245 = scmp.lt.s32.totalorder %s22, 4
      // Predicated region
      $region21: #{tpu_custom_call.1} parent=5 // pred_check
        %p246 = pneg %p245
      $region22: #{tpu_custom_call.1} parent=5 // pred_check_branch
        %248 = sbr.rel (%p246) target = $region24
      $region23: #{tpu_custom_call.1} parent=5 // pred_region
        // Predicated region
        $region25: #{tpu_custom_call.1} parent=23 // pred_check
          %p249 = pneg %p54
        $region26: #{tpu_custom_call.1} parent=23 // pred_check_branch
          %251 = sbr.rel (%p249) target = $region28
        $region27: #{tpu_custom_call.1} parent=23 // pred_region
          %s252 = sand.u32 %s22, 1
          %s253 = scalar_lea.sflag [#allocation3], %s252
          %s254 = sand.u32 %s44, 1
          %s255 = smul.addr %s254, 4
          %s256 = scalar_lea.vmem [#allocation2], %s255
          %s258 = ssub.s32 64, 64
          %259 = vsyncadd %s253, %s258
          %s260 = smul.addr %s29, 64
          %s261 = scalar_lea.hbm %s0, %s260
          %s263 = sshll.u32 %s256, 4
          %s264 = int_to_ptr.vmem [resolvable:$true] %s263
          %266 = dma.hbm_to_vmem [thread:$0]  %s261, 64, %s264, %s253
        $region28: #{tpu_custom_call.1} parent=23 // pred_fallthru
          _
        // Predicated region
        $region29: #{tpu_custom_call.1} parent=23 // pred_check
          %p267 = pneg %p80
        $region30: #{tpu_custom_call.1} parent=23 // pred_check_branch
          %269 = sbr.rel (%p267) target = $region32
        $region31: #{tpu_custom_call.1} parent=23 // pred_region
          %s270 = sand.u32 %s22, 1
          %s271 = scalar_lea.sflag [#allocation6], %s270
          %s272 = sand.u32 %s70, 1
          %s273 = smul.addr %s272, 16
          %s274 = scalar_lea.vmem [#allocation5], %s273
          %s276 = ssub.s32 256, 256
          %277 = vsyncadd %s271, %s276
          %s278 = smul.addr %s30, 4
          %s279 = smul.addr %s278, 64
          %s280 = scalar_lea.hbm %s1, %s279
          %s281 = sshll.u32 %s274, 4
          %s282 = int_to_ptr.vmem [resolvable:$true] %s281
          %287 = dma.hbm_to_vmem [thread:$0]  %s280, 256, %s282, %s271, 64, 64, 4
        $region32: #{tpu_custom_call.1} parent=23 // pred_fallthru
          _
        // Predicated region
        $region33: #{tpu_custom_call.1} parent=23 // pred_check
          %p288 = pneg %p106
        $region34: #{tpu_custom_call.1} parent=23 // pred_check_branch
          %290 = sbr.rel (%p288) target = $region36
        $region35: #{tpu_custom_call.1} parent=23 // pred_region
          %p291 = scmp.lt.s32.totalorder %s30, 1
          %s292 = scalar_select %p291, %s30, 1
          %s293 = scalar_lea.vmem %s2, %s292
        $region36: #{tpu_custom_call.1} parent=23 // pred_fallthru
          _
        // Predicated region
        $region37: #{tpu_custom_call.1} parent=23 // pred_check
          %p294 = pneg %p174
        $region38: #{tpu_custom_call.1} parent=23 // pred_check_branch
          %296 = sbr.rel (%p294) target = $region40
        $region39: #{tpu_custom_call.1} parent=23 // pred_region
          %s297 = sand.u32 %s22, 1
          %s298 = scalar_lea.sflag [#allocation3], %s297
          %s299 = sand.u32 %s164, 1
          %s300 = smul.addr %s299, 8
          %s301 = scalar_lea.vmem [#allocation10], %s300
          %s303 = ssub.s32 128, 128
          %304 = vsyncadd %s298, %s303
          %s305 = smul.addr %s29, 128
          %s306 = scalar_lea.hbm %s5, %s305
          %s308 = sshll.u32 %s301, 4
          %s309 = int_to_ptr.vmem [resolvable:$true] %s308
          %311 = dma.hbm_to_vmem [thread:$0]  %s306, 128, %s309, %s298
        $region40: #{tpu_custom_call.1} parent=23 // pred_fallthru
          _
      $region24: #{tpu_custom_call.1} parent=5 // pred_fallthru
        _
      %p312 = scmp.le.s32.totalorder 1, %s22
      %p313 = scmp.lt.s32.totalorder %s22, 5
      %p314 = pnand %p312, %p313
      %p315 = pneg %p314
      // Predicated region
      $region41: #{tpu_custom_call.1} parent=5 // pred_check
        _
      $region42: #{tpu_custom_call.1} parent=5 // pred_check_branch
        %317 = sbr.rel (%p314) target = $region44
      $region43: #{tpu_custom_call.1} parent=5 // pred_region
        %s318 = ssub.s32 %s22, 1
        %s319 = sand.u32 %s27, 1
        %s320 = scalar_lea.sflag [#allocation3], %s319
        %s321 = sand.u32 %s47, 1
        %s322 = smul.addr %s321, 4
        %s323 = scalar_lea.vmem [#allocation2], %s322
        // Predicated region
        $region45: #{tpu_custom_call.1} parent=43 // pred_check
          %p324 = pneg %p60
        $region46: #{tpu_custom_call.1} parent=43 // pred_check_branch
          %326 = sbr.rel (%p324) target = $region48
        $region47: #{tpu_custom_call.1} parent=43 // pred_region
          %327 = dma.done %s320, 64
        $region48: #{tpu_custom_call.1} parent=43 // pred_fallthru
          _
        %s328 = sand.u32 %s27, 1
        %s329 = scalar_lea.sflag [#allocation6], %s328
        %s330 = sand.u32 %s73, 1
        %s331 = smul.addr %s330, 16
        %s332 = scalar_lea.vmem [#allocation5], %s331
        // Predicated region
        $region49: #{tpu_custom_call.1} parent=43 // pred_check
          %p333 = pneg %p86
        $region50: #{tpu_custom_call.1} parent=43 // pred_check_branch
          %335 = sbr.rel (%p333) target = $region52
        $region51: #{tpu_custom_call.1} parent=43 // pred_region
          %336 = dma.done %s329, 256
        $region52: #{tpu_custom_call.1} parent=43 // pred_fallthru
          _
        // Predicated region
        $region53: #{tpu_custom_call.1} parent=43 // pred_check
          %p337 = pneg %p133
        $region54: #{tpu_custom_call.1} parent=43 // pred_check_branch
          %339 = sbr.rel (%p337) target = $region56
        $region55: #{tpu_custom_call.1} parent=43 // pred_region
          %340 = dma.done [#allocation6], 128
        $region56: #{tpu_custom_call.1} parent=43 // pred_fallthru
          _
        // Predicated region
        $region57: #{tpu_custom_call.1} parent=43 // pred_check
          %p341 = pneg %p154
        $region58: #{tpu_custom_call.1} parent=43 // pred_check_branch
          %343 = sbr.rel (%p341) target = $region60
        $region59: #{tpu_custom_call.1} parent=43 // pred_region
          %344 = dma.done [#allocation9], 128
        $region60: #{tpu_custom_call.1} parent=43 // pred_fallthru
          _
        %s345 = sand.u32 %s27, 1
        %s346 = scalar_lea.sflag [#allocation3], %s345
        %s347 = sand.u32 %s167, 1
        %s348 = smul.addr %s347, 8
        %s349 = scalar_lea.vmem [#allocation10], %s348
        // Predicated region
        $region61: #{tpu_custom_call.1} parent=43 // pred_check
          %p350 = pneg %p180
        $region62: #{tpu_custom_call.1} parent=43 // pred_check_branch
          %352 = sbr.rel (%p350) target = $region64
        $region63: #{tpu_custom_call.1} parent=43 // pred_region
          %353 = dma.done %s346, 128
        $region64: #{tpu_custom_call.1} parent=43 // pred_fallthru
          _
        %s354 = sand.u32 %s27, 1
        %s355 = scalar_lea.sflag [#allocation3], %s354
        %s356 = sand.u32 %s47, 1
        %s357 = smul.addr %s356, 4
        %s358 = scalar_lea.vmem [#allocation2], %s357
        %p359 = pneg %p60
        %p360 = pneg %p57
        %s361 = sand.u32 %s27, 1
        %s362 = scalar_lea.sflag [#allocation6], %s361
        %s363 = sand.u32 %s73, 1
        %s364 = smul.addr %s363, 16
        %s365 = scalar_lea.vmem [#allocation5], %s364
        %p366 = pneg %p86
        %p367 = pneg %p83
        %p368 = scmp.lt.s32.totalorder %s32, 1
        %s369 = scalar_select %p368, %s32, 1
        %s370 = scalar_lea.vmem %s2, %s369
        %p371 = pneg %p112
        %p372 = pneg %p109
        %p373 = pneg %p133
        %p374 = pneg %p130
        %p375 = pneg %p154
        %p376 = pneg %p151
        %s377 = sand.u32 %s27, 1
        %s378 = scalar_lea.sflag [#allocation3], %s377
        %s379 = sand.u32 %s167, 1
        %s380 = smul.addr %s379, 8
        %s381 = scalar_lea.vmem [#allocation10], %s380
        %p382 = pneg %p180
        %p383 = pneg %p177
        %p384 = pneg %p208
        %p385 = pneg %p205
        %s386 = sand.u32 %s195, 1
        %s387 = scalar_lea.sflag [#allocation4], %s386
        %s388 = sand.u32 %s195, 1
        %s389 = smul.addr %s388, 16
        %s390 = scalar_lea.vmem [#allocation11], %s389
        %p391 = scmp.lt.s32.totalorder %s32, 1
        %s392 = scalar_select %p391, %s32, 1
        %s393 = scalar_lea.vmem %s2, %s392
        %s394 = smul.u32 2, %s32
        %v396 = vld [vmem:[%s323] sm:$0xf]
        %v397 = vld [vmem:[%s332] sm:$0xf]
        %v398 = vld [vmem:[%s332 + $0x4] sm:$0xf]
        %v399 = vld [vmem:[%s332 + $0x8] sm:$0xf]
        %v400 = vld [vmem:[%s332 + $0xc] sm:$0xf]
        %v401 = vld [vmem:[%s393] sm:$0x1]
        %v403 = vlaneseq
        %v404 = vshrl.u32 %v403, 7
        %v405 = vsub.s32 0, %v404
        %v406 = vrot.slane %v401, %v405
        %v412 = vunpack.c.l.b16 %v397
        %v413 = vunpack.c.l.b16 %v398
        %v414 = vunpack.c.l.b16 %v399
        %v415 = vunpack.c.l.b16 %v400
        %v416 = vpack.c.b16 %v413, %v412
        %v417 = vpack.c.b16 %v415, %v414
        %vm420 = vcmask 261120
        %v422 = vsel %vm420, %v396, 0
        %424 = vmatprep.subr.bf16.mxu0 0
        %425 = vmatpush1.bf16.msra.mxu0 0
        %426 = vmatprep.subr.bf16.mxu0 0
        %427 = vmatpush1.bf16.msra.mxu0 0
        %428 = vmatprep.subr.bf16.mxu0 0
        %429 = vmatpush1.bf16.msra.mxu0 0
        %430 = vmatprep.subr.bf16.mxu0 0
        %431 = vmatpush1.bf16.msra.mxu0 0
        %432 = vmatprep.subr.bf16.mxu0 0
        %433 = vmatpush1.bf16.msra.mxu0 0
        %434 = vmatprep.subr.bf16.mxu0 0
        %435 = vmatpush1.bf16.msra.mxu0 0
        %436 = vmatprep.subr.bf16.mxu0 0
        %437 = vmatpush1.bf16.msra.mxu0 %v417
        %438 = vmatprep.subr.bf16.mxu0 0
        %439 = vmatpush1.bf16.msra.mxu0 %v416
        %440 = vmatprep.subr.bf16.mxu0 0
        %441 = vmatpush2.bf16.msra.mxu0 0
        %442 = vmatprep.subr.bf16.mxu0 0
        %443 = vmatpush2.bf16.msra.mxu0 0
        %444 = vmatprep.subr.bf16.mxu0 0
        %445 = vmatpush2.bf16.msra.mxu0 0
        %446 = vmatprep.subr.bf16.mxu0 0
        %447 = vmatpush2.bf16.msra.mxu0 0
        %448 = vmatprep.subr.bf16.mxu0 0
        %449 = vmatpush2.bf16.msra.mxu0 0
        %450 = vmatprep.subr.bf16.mxu0 0
        %451 = vmatpush2.bf16.msra.mxu0 0
        %452 = vmatprep.subr.bf16.mxu0 0
        %453 = vmatpush2.bf16.msra.mxu0 0
        %454 = vmatprep.subr.bf16.mxu0 0
        %455 = vmatpush2.bf16.msra.mxu0 0
        %456 = vmatprep.mubr.bf16.mxu0 0
        %457 = vmatmul.mubr.bf16.gmra.mxu0 %v422
        %v458 = vpop.f32.mrf.mxu0
        %v459 = vadd.f32 %v406, %v458
        %v460 = vpop.f32.mrf.mxu0
        %v461 = vpop.f32.mrf.mxu0
        %v462 = vpop.f32.mrf.mxu0
        %463 = vdwg.mxu0
        %v464 = vld [vmem:[#allocation7] sm:$0xff]
        %v465 = vld [vmem:[#allocation8] sm:$0xff]
        %v466 = vld [vmem:[%s349] sm:$0xff]
        %v467 = vmul.f32 %v459, %v465
        %469 = vrot.lane.b32.xlu0 %v464, 8
        %v470 = vpop.permute.xlu0 %469
        %v472 = vmul.f32 %v459, %v470
        %474 = vrot.lane.b32.xlu0 %v472, 120
        %v475 = vpop.permute.xlu0 %474
        %v477 = vsub.f32 %v467, %v475
        %v478 = vmul.f32 %v459, %v464
        %480 = vrot.lane.b32.xlu0 %v465, 8
        %v481 = vpop.permute.xlu0 %480
        %v483 = vmul.f32 %v459, %v481
        %485 = vrot.lane.b32.xlu0 %v483, 120
        %v486 = vpop.permute.xlu0 %485
        %v488 = vadd.f32 %v478, %v486
        %490 = vrot.lane.b32.xlu0 %v488, 8
        %v491 = vpop.permute.xlu0 %490
        %vm493 = vcmask 64512
        %v494 = vsel %vm493, %v477, %v491
        %v495 = vpack.c.bf16 %v494, %v494
        %496 = vrot.lane.b32.xlu0 %v465, 16
        %v497 = vpop.permute.xlu0 %496
        %v499 = vmul.f32 %v459, %v497
        %500 = vrot.lane.b32.xlu0 %v464, 24
        %v501 = vpop.permute.xlu0 %500
        %v503 = vmul.f32 %v459, %v501
        %505 = vrot.lane.b32.xlu0 %v503, 120
        %v506 = vpop.permute.xlu0 %505
        %v508 = vsub.f32 %v499, %v506
        %509 = vrot.lane.b32.xlu0 %v464, 16
        %v510 = vpop.permute.xlu0 %509
        %v512 = vmul.f32 %v459, %v510
        %513 = vrot.lane.b32.xlu0 %v465, 24
        %v514 = vpop.permute.xlu0 %513
        %v516 = vmul.f32 %v459, %v514
        %518 = vrot.lane.b32.xlu0 %v516, 120
        %v519 = vpop.permute.xlu0 %518
        %v521 = vadd.f32 %v512, %v519
        %523 = vrot.lane.b32.xlu0 %v508, 112
        %v524 = vpop.permute.xlu0 %523
        %527 = vrot.lane.b32.xlu0 %v521, 120
        %v528 = vpop.permute.xlu0 %527
        %v530 = vsel %vm493, %v524, %v528
        %v531 = vpack.c.bf16 %v530, %v530
        %vm532 = vcmask 130048
        %v534 = vsel %vm532, %v495, 0
        %v537 = vsel %vm532, %v531, 0
        %539 = vmatprep.subr.bf16.mxu0 0
        %540 = vmatpush1.bf16.xpose.msra.mxu0 0
        %541 = vmatprep.subr.bf16.mxu0 0
        %542 = vmatpush1.bf16.xpose.msra.mxu0 0
        %543 = vmatprep.subr.bf16.mxu0 0
        %544 = vmatpush1.bf16.xpose.msra.mxu0 0
        %545 = vmatprep.subr.bf16.mxu0 0
        %546 = vmatpush1.bf16.xpose.msra.mxu0 0
        %547 = vmatprep.subr.bf16.mxu0 0
        %548 = vmatpush1.bf16.xpose.msra.mxu0 0
        %549 = vmatprep.subr.bf16.mxu0 0
        %550 = vmatpush1.bf16.xpose.msra.mxu0 0
        %551 = vmatprep.subr.bf16.mxu0 0
        %552 = vmatpush1.bf16.xpose.msra.mxu0 0
        %553 = vmatprep.subr.bf16.mxu0 0
        %554 = vmatpush1.bf16.xpose.msra.mxu0 %v537
        %555 = vmatprep.subr.bf16.mxu0 0
        %556 = vmatpush2.bf16.xpose.msra.mxu0 0
        %557 = vmatprep.subr.bf16.mxu0 0
        %558 = vmatpush2.bf16.xpose.msra.mxu0 0
        %559 = vmatprep.subr.bf16.mxu0 0
        %560 = vmatpush2.bf16.xpose.msra.mxu0 0
        %561 = vmatprep.subr.bf16.mxu0 0
        %562 = vmatpush2.bf16.xpose.msra.mxu0 0
        %563 = vmatprep.subr.bf16.mxu0 0
        %564 = vmatpush2.bf16.xpose.msra.mxu0 0
        %565 = vmatprep.subr.bf16.mxu0 0
        %566 = vmatpush2.bf16.xpose.msra.mxu0 0
        %567 = vmatprep.subr.bf16.mxu0 0
        %568 = vmatpush2.bf16.xpose.msra.mxu0 0
        %569 = vmatprep.subr.bf16.mxu0 0
        %570 = vmatpush2.bf16.xpose.msra.mxu0 0
        %571 = vmatprep.mubr.bf16.mxu0 0
        %572 = vmatmul.mubr.bf16.gmra.mxu0 %v534
        %v573 = vpop.f32.mrf.mxu0
        %v574 = vadd.f32 0.0, %v573
        %v575 = vpop.f32.mrf.mxu0
        %v576 = vpop.f32.mrf.mxu0
        %v577 = vpop.f32.mrf.mxu0
        %578 = vdwg.mxu0
        %v579 = vsub.f32 %v574, %v466
        %580 = vst.msk [vmem:[%s390] sm:$0xff] %vm493, %v579
        %581 = vrot.lane.b32.xlu0 %v465, 32
        %v582 = vpop.permute.xlu0 %581
        %v584 = vmul.f32 %v459, %v582
        %585 = vrot.lane.b32.xlu0 %v464, 40
        %v586 = vpop.permute.xlu0 %585
        %v588 = vmul.f32 %v459, %v586
        %590 = vrot.lane.b32.xlu0 %v588, 120
        %v591 = vpop.permute.xlu0 %590
        %v593 = vsub.f32 %v584, %v591
        %594 = vrot.lane.b32.xlu0 %v464, 32
        %v595 = vpop.permute.xlu0 %594
        %v597 = vmul.f32 %v459, %v595
        %598 = vrot.lane.b32.xlu0 %v465, 40
        %v599 = vpop.permute.xlu0 %598
        %v601 = vmul.f32 %v459, %v599
        %603 = vrot.lane.b32.xlu0 %v601, 120
        %v604 = vpop.permute.xlu0 %603
        %v606 = vadd.f32 %v597, %v604
        %608 = vrot.lane.b32.xlu0 %v593, 96
        %v609 = vpop.permute.xlu0 %608
        %612 = vrot.lane.b32.xlu0 %v606, 104
        %v613 = vpop.permute.xlu0 %612
        %v615 = vsel %vm493, %v609, %v613
        %v616 = vpack.c.bf16 %v615, %v615
        %617 = vrot.lane.b32.xlu0 %v465, 48
        %v618 = vpop.permute.xlu0 %617
        %v620 = vmul.f32 %v459, %v618
        %621 = vrot.lane.b32.xlu0 %v464, 56
        %v622 = vpop.permute.xlu0 %621
        %v624 = vmul.f32 %v459, %v622
        %626 = vrot.lane.b32.xlu0 %v624, 120
        %v627 = vpop.permute.xlu0 %626
        %v629 = vsub.f32 %v620, %v627
        %630 = vrot.lane.b32.xlu0 %v464, 48
        %v631 = vpop.permute.xlu0 %630
        %v633 = vmul.f32 %v459, %v631
        %634 = vrot.lane.b32.xlu0 %v465, 56
        %v635 = vpop.permute.xlu0 %634
        %v637 = vmul.f32 %v459, %v635
        %639 = vrot.lane.b32.xlu0 %v637, 120
        %v640 = vpop.permute.xlu0 %639
        %v642 = vadd.f32 %v633, %v640
        %644 = vrot.lane.b32.xlu0 %v629, 80
        %v645 = vpop.permute.xlu0 %644
        %648 = vrot.lane.b32.xlu0 %v642, 88
        %v649 = vpop.permute.xlu0 %648
        %v651 = vsel %vm493, %v645, %v649
        %v652 = vpack.c.bf16 %v651, %v651
        %v654 = vsel %vm532, %v616, 0
        %v657 = vsel %vm532, %v652, 0
        %659 = vmatprep.subr.bf16.mxu0 0
        %660 = vmatpush1.bf16.xpose.msra.mxu0 0
        %661 = vmatprep.subr.bf16.mxu0 0
        %662 = vmatpush1.bf16.xpose.msra.mxu0 0
        %663 = vmatprep.subr.bf16.mxu0 0
        %664 = vmatpush1.bf16.xpose.msra.mxu0 0
        %665 = vmatprep.subr.bf16.mxu0 0
        %666 = vmatpush1.bf16.xpose.msra.mxu0 0
        %667 = vmatprep.subr.bf16.mxu0 0
        %668 = vmatpush1.bf16.xpose.msra.mxu0 0
        %669 = vmatprep.subr.bf16.mxu0 0
        %670 = vmatpush1.bf16.xpose.msra.mxu0 0
        %671 = vmatprep.subr.bf16.mxu0 0
        %672 = vmatpush1.bf16.xpose.msra.mxu0 0
        %673 = vmatprep.subr.bf16.mxu0 0
        %674 = vmatpush1.bf16.xpose.msra.mxu0 %v657
        %675 = vmatprep.subr.bf16.mxu0 0
        %676 = vmatpush2.bf16.xpose.msra.mxu0 0
        %677 = vmatprep.subr.bf16.mxu0 0
        %678 = vmatpush2.bf16.xpose.msra.mxu0 0
        %679 = vmatprep.subr.bf16.mxu0 0
        %680 = vmatpush2.bf16.xpose.msra.mxu0 0
        %681 = vmatprep.subr.bf16.mxu0 0
        %682 = vmatpush2.bf16.xpose.msra.mxu0 0
        %683 = vmatprep.subr.bf16.mxu0 0
        %684 = vmatpush2.bf16.xpose.msra.mxu0 0
        %685 = vmatprep.subr.bf16.mxu0 0
        %686 = vmatpush2.bf16.xpose.msra.mxu0 0
        %687 = vmatprep.subr.bf16.mxu0 0
        %688 = vmatpush2.bf16.xpose.msra.mxu0 0
        %689 = vmatprep.subr.bf16.mxu0 0
        %690 = vmatpush2.bf16.xpose.msra.mxu0 0
        %691 = vmatprep.mubr.bf16.mxu0 0
        %692 = vmatmul.mubr.bf16.gmra.mxu0 %v654
        %v693 = vpop.f32.mrf.mxu0
        %v694 = vadd.f32 0.0, %v693
        %v695 = vpop.f32.mrf.mxu0
        %v696 = vpop.f32.mrf.mxu0
        %v697 = vpop.f32.mrf.mxu0
        %698 = vdwg.mxu0
        %v699 = vsub.f32 %v694, %v466
        %s700 = scalar_lea.vmem %s390, 8 [#allocation11]
        %701 = vst.msk [vmem:[%s700] sm:$0xff] %vm493, %v699
        %s702 = sand.u32 %s195, 1
        %s703 = scalar_lea.sflag [#allocation4], %s702
        %s704 = sand.u32 %s195, 1
        %s705 = smul.addr %s704, 16
        %s706 = scalar_lea.vmem [#allocation11], %s705
        // Predicated region
        $region65: #{tpu_custom_call.1} parent=43 // pred_check
          %p707 = pneg %p205
        $region66: #{tpu_custom_call.1} parent=43 // pred_check_branch
          %709 = sbr.rel (%p707) target = $region68
        $region67: #{tpu_custom_call.1} parent=43 // pred_region
          %s710 = smul.u32 2, %s32
          %s712 = ssub.s32 256, 256
          %713 = vsyncadd %s703, %s712
          %s714 = smul.addr %s31, 4
          %s715 = sadd.s32 %s710, %s714
          %s716 = smul.addr %s715, 128
          %s717 = scalar_lea.hbm %s6, %s716
          %s718 = sshll.u32 %s706, 4
          %s719 = int_to_ptr.vmem [resolvable:$true] %s718
          %724 = dma.vmem_to_hbm [thread:$0]  %s719, 256, %s717, %s703, 128, 128, 8
        $region68: #{tpu_custom_call.1} parent=43 // pred_fallthru
          _
      $region44: #{tpu_custom_call.1} parent=5 // pred_fallthru
        _
      %p725 = scmp.le.s32.totalorder 2, %s22
      // Predicated region
      $region69: #{tpu_custom_call.1} parent=5 // pred_check
        %p726 = pneg %p725
      $region70: #{tpu_custom_call.1} parent=5 // pred_check_branch
        %728 = sbr.rel (%p726) target = $region72
      $region71: #{tpu_custom_call.1} parent=5 // pred_region
        %s729 = ssub.s32 %s22, 2
        // Predicated region
        $region73: #{tpu_custom_call.1} parent=71 // pred_check
          %p730 = pneg %p211
        $region74: #{tpu_custom_call.1} parent=71 // pred_check_branch
          %732 = sbr.rel (%p730) target = $region76
        $region75: #{tpu_custom_call.1} parent=71 // pred_region
          %s733 = sand.u32 %s196, 1
          %s734 = scalar_lea.sflag [#allocation4], %s733
          %s735 = sand.u32 %s196, 1
          %s736 = smul.addr %s735, 16
          %s737 = scalar_lea.vmem [#allocation11], %s736
          %738 = dma.done %s734, 256
        $region76: #{tpu_custom_call.1} parent=71 // pred_fallthru
          _
      $region72: #{tpu_custom_call.1} parent=5 // pred_fallthru
        _
    $region6: #{tpu_custom_call.1} parent=1 // loop_footer
      %s26 = sadd.s32 1, %s22
    $region7: #{tpu_custom_call.1} parent=1 // loop_footer_branch
      %21 = sbr.rel target = $region3
    $region8: #{tpu_custom_call.1} parent=1 // loop_exit
      _
    %739 = vsyncpa [#allocation3], 1
    %s740 = scalar_lea.sflag [#allocation3], 1
    %741 = vsyncpa %s740, 1
    %742 = vsyncpa [#allocation6], 1
    %s743 = scalar_lea.sflag [#allocation6], 1
    %744 = vsyncpa %s743, 1
    %745 = vsyncpa [#allocation9], 1
    %746 = vsyncpa [#allocation4], 1
    %s747 = scalar_lea.sflag [#allocation4], 1
    %748 = vsyncpa %s747, 1

</llo_original>
